<compile_context>
chip_gen: v5e
topology: v5e:2x2
jax: 0.10.0
libtpu: 0.0.40
codegen_flags: <defaults>
</compile_context>

<pallas_src>
import jax
import jax.numpy as jnp
from jax.experimental import pallas as pl
from jax.experimental.pallas import tpu as pltpu


def _full_spec(shape):
    nd = len(shape)
    return pl.BlockSpec(shape, lambda i, _nd=nd: (0,) * _nd)


# ---------------------------------------------------------------------------
# Fused kernel: folded reduce-convs + both relation blocks + concat
# ---------------------------------------------------------------------------
def _make_kernel(person_counts, object_counts, max_person, max_object):
    person_counts = tuple(int(p) for p in person_counts)
    object_counts = tuple(int(o) for o in object_counts)

    def segment_max_per_person(y_all, other_counts, max_things, d):
        """Per-image max over the reduced+folded 'other' rows, broadcast to that image's
        persons.  Zero-padded slots of the reference contribute exactly 0 (conv bias == 0),
        hence the max-with-0 when an image has fewer neighbors than max_things.
        TODO(synk): the torch.randperm subsampling branch (count > max_things) takes the
        first max_things rows instead (non-random); identical whenever count <= max_things."""
        blocks, off = [], 0
        for pnum, onum in zip(person_counts, other_counts):
            take = min(onum, max_things)
            if take == 0:
                img_max = jnp.zeros((1, d), jnp.float32)
            else:
                img_max = jnp.max(y_all[off:off + take, :], axis=0, keepdims=True)
                if take < max_things:           # zero-padded slots participate in the max
                    img_max = jnp.maximum(img_max, 0.0)
            blocks.append(jnp.broadcast_to(img_max, (pnum, d)))
            off += onum
        return jnp.concatenate(blocks, axis=0)   # [Np, d]

    def kernel(pf_ref, of_ref, w_pf_ref, w_of_ref, b_ref, out_ref):
        d = w_of_ref.shape[1]
        # One K=C MXU pass per (un-duplicated) feature matrix: bf16 operands, f32 acc.
        # Columns of w_pf: [key->obj branch | key->person branch | other->person branch].
        pf_all = jnp.dot(pf_ref[...], w_pf_ref[...],
                         preferred_element_type=jnp.float32)            # [Np, 3D]
        yo_obj = jnp.dot(of_ref[...], w_of_ref[...],
                         preferred_element_type=jnp.float32)            # [No, D]
        yp = pf_all[:, : 2 * d] + b_ref[...]     # both branches' key terms + MLP biases
        yo_per = pf_all[:, 2 * d:]               # person branch 'other' term

        # max over relation slots == per-image segment max (VPU/XLU, f32).
        # TODO(synk): the static per-image unroll is fine for typical batches (<=32 images);
        # a very large batch would want a person-tiled grid axis instead.
        obj_max = segment_max_per_person(yo_obj, object_counts, max_object, d)
        per_max = segment_max_per_person(yo_per, person_counts, max_person, d)

        # Final torch.cat fused into one lane-dense [Np, 2D] store.
        out_ref[...] = (yp + jnp.concatenate([obj_max, per_max], axis=1)).astype(out_ref.dtype)

    return kernel


# ---------------------------------------------------------------------------
# Forward
# ---------------------------------------------------------------------------
def aog_forward(params, person_feature, person_counts, obj_feature, object_counts,
                max_person, max_object):
    # person_feature: [Np, C, 1, 1, 1]; obj_feature: [No, C, 1, 1, 1]  (PyTorch NCHW+T)
    n, c = person_feature.shape[0], person_feature.shape[1]
    d = params['w_p'].shape[1]
    pf = person_feature.reshape(n, c)
    of = obj_feature.reshape(obj_feature.shape[0], c)

    # Fold the chained (reduce conv) @ (MLP half) matmuls at trace time: each branch
    # becomes a single K=C matmul inside the kernel (conv biases are 0 per init_layer).
    w_mlp_obj, w_mlp_per = params['w_mlp_obj'], params['w_mlp_per']
    w_key_obj = params['w_p'] @ w_mlp_obj[:d]    # [C, D]
    w_key_per = params['w_p'] @ w_mlp_per[:d]    # [C, D]
    w_oth_per = params['w_pr'] @ w_mlp_per[d:]   # [C, D]
    w_oth_obj = params['w_o'] @ w_mlp_obj[d:]    # [C, D]

    # bf16 MXU operands; epilogue, biases and output stay f32.
    w_pf = jnp.concatenate([w_key_obj, w_key_per, w_oth_per], axis=1).astype(jnp.bfloat16)
    w_of = w_oth_obj.astype(jnp.bfloat16)
    b_keys = jnp.concatenate([params['b_mlp_obj'], params['b_mlp_per']]).reshape(1, 2 * d)
    pf_bf = pf.astype(jnp.bfloat16)
    of_bf = of.astype(jnp.bfloat16)

    kernel = _make_kernel(person_counts, object_counts, max_person, max_object)

    # After de-duplication the whole problem (features + folded weights + the [Np,3D]
    # intermediate) is small even at production sizes (C~2304, D~512, hundreds of persons:
    # ~20 MB bf16), so a single full-array VMEM block is safe on v5e/v6e/v7x default limits.
    # TODO(synk): for very large Np, add a "parallel" person grid axis (tm multiple of 8,
    # lane-dense 2D output tiles) so v7x's two TensorCores split the person rows.
    out = pl.pallas_call(
        kernel,
        out_shape=jax.ShapeDtypeStruct((n, 2 * d), person_feature.dtype),
        grid=(1,),
        in_specs=[_full_spec(pf_bf.shape),
                  _full_spec(of_bf.shape),
                  _full_spec(w_pf.shape),
                  _full_spec(w_of.shape),
                  _full_spec(b_keys.shape)],
        out_specs=_full_spec((n, 2 * d)),
        compiler_params=pltpu.CompilerParams(dimension_semantics=("arbitrary",)),
    )(pf_bf, of_bf, w_pf, w_of, b_keys)

    return out[:, :, None, None, None]   # [Np, 2*D, 1, 1, 1]


# ---------------------------------------------------------------------------
# Parameter init (mirrors the PyTorch module: conv biases forced to 0)
# ---------------------------------------------------------------------------
def init_params(key, dim_person, dim_inner, conv_init_std=0.01):
    keys = jax.random.split(key, 5)

    def conv_w(k):
        # PyTorch 1x1 conv weight [Dout, Din, 1, 1] ~ N(0, std); stored transposed [Din, Dout].
        return (conv_init_std * jax.random.normal(k, (dim_person, dim_inner))).astype(jnp.float32)

    def linear_wb(k):
        # PyTorch default nn.Linear init: U(-1/sqrt(fan_in), 1/sqrt(fan_in)); stored transposed.
        bound = 1.0 / (2 * dim_inner) ** 0.5
        k1, k2 = jax.random.split(k)
        w = jax.random.uniform(k1, (2 * dim_inner, dim_inner), minval=-bound, maxval=bound)
        b = jax.random.uniform(k2, (dim_inner,), minval=-bound, maxval=bound)
        return w.astype(jnp.float32), b.astype(jnp.float32)

    w_mlp_o, b_mlp_o = linear_wb(keys[3])
    w_mlp_p, b_mlp_p = linear_wb(keys[4])
    return dict(
        w_p=conv_w(keys[0]), w_pr=conv_w(keys[1]), w_o=conv_w(keys[2]),
        w_mlp_obj=w_mlp_o, b_mlp_obj=b_mlp_o,
        w_mlp_per=w_mlp_p, b_mlp_per=b_mlp_p,
    )


# ---------------------------------------------------------------------------
# Pure-JAX reference (direct translation of the PyTorch forward) for validation
# ---------------------------------------------------------------------------
def aog_reference(params, person_feature, person_counts, obj_feature, object_counts,
                  max_person, max_object):
    n, c = person_feature.shape[0], person_feature.shape[1]
    d = params['w_p'].shape[1]
    pf = person_feature.reshape(n, c)
    of = obj_feature.reshape(obj_feature.shape[0], c)

    def gather(things, counts_o, max_t):
        res, idx = [], 0
        for pnum, onum in zip(person_counts, counts_o):
            tmp = jnp.zeros((pnum, max_t, things.shape[1]), things.dtype)
            take = min(onum, max_t)
            tmp = tmp.at[:, :take].set(things[idx:idx + take][None])
            res.append(tmp)
            idx += onum
        return jnp.concatenate(res, axis=0)

    p_red = pf @ params['w_p']
    pr_red = gather(pf @ params['w_pr'], person_counts, max_person)               # [N, MP, D]
    o_red = (gather(of, object_counts, max_object).reshape(-1, c)
             @ params['w_o']).reshape(n, max_object, d)                           # [N, MO, D]

    def relation(others, w, b):
        m = others.shape[1]
        key_rep = jnp.broadcast_to(p_red[:, None, :], (n, m, d))
        x = jnp.concatenate([key_rep, others], axis=2).reshape(n * m, 2 * d)
        return jnp.max((x @ w + b).reshape(n, m, d), axis=1)

    oi = relation(o_red, params['w_mlp_obj'], params['b_mlp_obj'])
    pi = relation(pr_red, params['w_mlp_per'], params['b_mlp_per'])
    return jnp.concatenate([oi, pi], axis=1)[:, :, None, None, None]


# ---------------------------------------------------------------------------
if __name__ == "__main__":
    key = jax.random.PRNGKey(0)
    dim_person, dim_inner = 64, 32
    max_person, max_object = 4, 4
    person_counts = (4, 4)     # persons per image (batch of 2 images)
    object_counts = (2, 3)     # objects per image
    n_persons, n_objects = sum(person_counts), sum(object_counts)

    kp, ko, kw = jax.random.split(key, 3)
    person_feature = jax.random.normal(kp, (n_persons, dim_person, 1, 1, 1), jnp.float32)
    obj_feature = jax.random.normal(ko, (n_objects, dim_person, 1, 1, 1), jnp.float32)
    params = init_params(kw, dim_person, dim_inner)

    out = aog_forward(params, person_feature, person_counts, obj_feature,
                      object_counts, max_person, max_object)
    out = jax.block_until_ready(out)
    assert out.shape == (n_persons, 2 * dim_inner, 1, 1, 1), out.shape
    assert bool(jnp.all(jnp.isfinite(out)))

    ref = aog_reference(params, person_feature, person_counts, obj_feature,
                        object_counts, max_person, max_object)
    assert bool(jnp.allclose(out, ref, rtol=5e-2, atol=2e-2)), \
        float(jnp.max(jnp.abs(out - ref)))
    print("KERNEL_OK")
</pallas_src>

<mosaic_0001>
module attributes {stable_mosaic.version = 11 : i64} {
  func.func @kernel(%arg0: i32, %arg1: memref<8x64xbf16, #tpu.memory_space<vmem>>, %arg2: memref<5x64xbf16, #tpu.memory_space<vmem>>, %arg3: memref<64x96xbf16, #tpu.memory_space<vmem>>, %arg4: memref<64x32xbf16, #tpu.memory_space<vmem>>, %arg5: memref<1x64xf32, #tpu.memory_space<vmem>>, %arg6: memref<8x64xf32, #tpu.memory_space<vmem>>) attributes {dimension_semantics = [#tpu.dimension_semantics<arbitrary>], iteration_bounds = array<i64: 1>, scalar_prefetch = 0 : i64, scratch_operands = 0 : i64, tpu.core_type = #tpu.core_type<tc>, window_params = [{pipeline_mode = #tpu.pipeline_mode<synchronous>, transform_indices = @transform_0, window_bounds = array<i64: 8, 64>}, {pipeline_mode = #tpu.pipeline_mode<synchronous>, transform_indices = @transform_1, window_bounds = array<i64: 5, 64>}, {pipeline_mode = #tpu.pipeline_mode<synchronous>, transform_indices = @transform_2, window_bounds = array<i64: 64, 96>}, {pipeline_mode = #tpu.pipeline_mode<synchronous>, transform_indices = @transform_3, window_bounds = array<i64: 64, 32>}, {pipeline_mode = #tpu.pipeline_mode<synchronous>, transform_indices = @transform_4, window_bounds = array<i64: 1, 64>}, {pipeline_mode = #tpu.pipeline_mode<synchronous>, transform_indices = @transform_5, window_bounds = array<i64: 8, 64>}]} {
    %c0 = arith.constant 0 : index
    %c0_0 = arith.constant 0 : index
    %0 = vector.load %arg1[%c0, %c0_0] : memref<8x64xbf16, #tpu.memory_space<vmem>>, vector<8x64xbf16>
    %c0_1 = arith.constant 0 : index
    %c0_2 = arith.constant 0 : index
    %1 = vector.load %arg3[%c0_1, %c0_2] : memref<64x96xbf16, #tpu.memory_space<vmem>>, vector<64x96xbf16>
    %cst = arith.constant dense<0.000000e+00> : vector<8x96xf32>
    %2 = tpu.matmul %0, %1, %cst {dimension_numbers = #tpu.dot_dimension_numbers<[1], [0], [0], [1], [0, 0, 1, 1], [], []>} : vector<8x64xbf16>, vector<64x96xbf16>, vector<8x96xf32> -> vector<8x96xf32>
    %c0_3 = arith.constant 0 : index
    %c0_4 = arith.constant 0 : index
    %3 = vector.load %arg2[%c0_3, %c0_4] : memref<5x64xbf16, #tpu.memory_space<vmem>>, vector<5x64xbf16>
    %c0_5 = arith.constant 0 : index
    %c0_6 = arith.constant 0 : index
    %4 = vector.load %arg4[%c0_5, %c0_6] : memref<64x32xbf16, #tpu.memory_space<vmem>>, vector<64x32xbf16>
    %cst_7 = arith.constant dense<0.000000e+00> : vector<5x32xf32>
    %5 = tpu.matmul %3, %4, %cst_7 {dimension_numbers = #tpu.dot_dimension_numbers<[1], [0], [0], [1], [0, 0, 1, 1], [], []>} : vector<5x64xbf16>, vector<64x32xbf16>, vector<5x32xf32> -> vector<5x32xf32>
    %6 = vector.extract_strided_slice %2 {offsets = [0, 0], sizes = [8, 64], strides = [1, 1]} : vector<8x96xf32> to vector<8x64xf32>
    %c0_8 = arith.constant 0 : index
    %c0_9 = arith.constant 0 : index
    %7 = vector.load %arg5[%c0_8, %c0_9] : memref<1x64xf32, #tpu.memory_space<vmem>>, vector<1x64xf32>
    %8 = vector.broadcast %7 : vector<1x64xf32> to vector<8x64xf32>
    %9 = arith.addf %6, %8 : vector<8x64xf32>
    %10 = vector.extract_strided_slice %2 {offsets = [0, 64], sizes = [8, 32], strides = [1, 1]} : vector<8x96xf32> to vector<8x32xf32>
    %11 = vector.extract_strided_slice %5 {offsets = [0, 0], sizes = [2, 32], strides = [1, 1]} : vector<5x32xf32> to vector<2x32xf32>
    %cst_10 = arith.constant dense<0xFF800000> : vector<32xf32>
    %12 = vector.multi_reduction <maximumf>, %11, %cst_10 [0] : vector<2x32xf32> to vector<32xf32>
    %13 = vector.shape_cast %12 : vector<32xf32> to vector<1x32xf32>
    %cst_11 = arith.constant 0.000000e+00 : f32
    %14 = vector.broadcast %cst_11 : f32 to vector<1x32xf32>
    %15 = arith.maximumf %13, %14 : vector<1x32xf32>
    %16 = vector.shape_cast %15 : vector<1x32xf32> to vector<1x32xf32>
    %17 = vector.broadcast %16 : vector<1x32xf32> to vector<4x32xf32>
    %18 = vector.extract_strided_slice %5 {offsets = [2, 0], sizes = [3, 32], strides = [1, 1]} : vector<5x32xf32> to vector<3x32xf32>
    %cst_12 = arith.constant dense<0xFF800000> : vector<32xf32>
    %19 = vector.multi_reduction <maximumf>, %18, %cst_12 [0] : vector<3x32xf32> to vector<32xf32>
    %20 = vector.shape_cast %19 : vector<32xf32> to vector<1x32xf32>
    %cst_13 = arith.constant 0.000000e+00 : f32
    %21 = vector.broadcast %cst_13 : f32 to vector<1x32xf32>
    %22 = arith.maximumf %20, %21 : vector<1x32xf32>
    %23 = vector.shape_cast %22 : vector<1x32xf32> to vector<1x32xf32>
    %24 = vector.broadcast %23 : vector<1x32xf32> to vector<4x32xf32>
    %25 = tpu.concatenate %17, %24 in 0 : vector<4x32xf32>, vector<4x32xf32> -> vector<8x32xf32>
    %26 = vector.extract_strided_slice %10 {offsets = [0, 0], sizes = [4, 32], strides = [1, 1]} : vector<8x32xf32> to vector<4x32xf32>
    %cst_14 = arith.constant dense<0xFF800000> : vector<32xf32>
    %27 = vector.multi_reduction <maximumf>, %26, %cst_14 [0] : vector<4x32xf32> to vector<32xf32>
    %28 = vector.shape_cast %27 : vector<32xf32> to vector<1x32xf32>
    %29 = vector.shape_cast %28 : vector<1x32xf32> to vector<1x32xf32>
    %30 = vector.broadcast %29 : vector<1x32xf32> to vector<4x32xf32>
    %31 = vector.extract_strided_slice %10 {offsets = [4, 0], sizes = [4, 32], strides = [1, 1]} : vector<8x32xf32> to vector<4x32xf32>
    %cst_15 = arith.constant dense<0xFF800000> : vector<32xf32>
    %32 = vector.multi_reduction <maximumf>, %31, %cst_15 [0] : vector<4x32xf32> to vector<32xf32>
    %33 = vector.shape_cast %32 : vector<32xf32> to vector<1x32xf32>
    %34 = vector.shape_cast %33 : vector<1x32xf32> to vector<1x32xf32>
    %35 = vector.broadcast %34 : vector<1x32xf32> to vector<4x32xf32>
    %36 = tpu.concatenate %30, %35 in 0 : vector<4x32xf32>, vector<4x32xf32> -> vector<8x32xf32>
    %37 = tpu.concatenate %25, %36 in 1 : vector<8x32xf32>, vector<8x32xf32> -> vector<8x64xf32>
    %38 = arith.addf %9, %37 : vector<8x64xf32>
    %c0_16 = arith.constant 0 : index
    %c0_17 = arith.constant 0 : index
    %39 = vector.load %arg6[%c0_16, %c0_17] : memref<8x64xf32, #tpu.memory_space<vmem>>, vector<8x64xf32>
    tpu.vector_store %arg6[%c0_16, %c0_17], %38 {strides = array<i32>} : memref<8x64xf32, #tpu.memory_space<vmem>>, vector<8x64xf32>,
    return
  }
  func.func @transform_0(%arg0: i32) -> (i32, i32) {
    %c0_i32 = arith.constant 0 : i32
    %c0_i32_0 = arith.constant 0 : i32
    %c0_i32_1 = arith.constant 0 : i32
    return %c0_i32, %c0_i32_0 : i32, i32
  }
  func.func @transform_1(%arg0: i32) -> (i32, i32) {
    %c0_i32 = arith.constant 0 : i32
    %c0_i32_0 = arith.constant 0 : i32
    %c0_i32_1 = arith.constant 0 : i32
    return %c0_i32, %c0_i32_0 : i32, i32
  }
  func.func @transform_2(%arg0: i32) -> (i32, i32) {
    %c0_i32 = arith.constant 0 : i32
    %c0_i32_0 = arith.constant 0 : i32
    %c0_i32_1 = arith.constant 0 : i32
    return %c0_i32, %c0_i32_0 : i32, i32
  }
  func.func @transform_3(%arg0: i32) -> (i32, i32) {
    %c0_i32 = arith.constant 0 : i32
    %c0_i32_0 = arith.constant 0 : i32
    %c0_i32_1 = arith.constant 0 : i32
    return %c0_i32, %c0_i32_0 : i32, i32
  }
  func.func @transform_4(%arg0: i32) -> (i32, i32) {
    %c0_i32 = arith.constant 0 : i32
    %c0_i32_0 = arith.constant 0 : i32
    %c0_i32_1 = arith.constant 0 : i32
    return %c0_i32, %c0_i32_0 : i32, i32
  }
  func.func @transform_5(%arg0: i32) -> (i32, i32) {
    %c0_i32 = arith.constant 0 : i32
    %c0_i32_0 = arith.constant 0 : i32
    %c0_i32_1 = arith.constant 0 : i32
    return %c0_i32, %c0_i32_0 : i32, i32
  }
}

</mosaic_0001>

<llo_original>
// kernel: tpu_custom_call.1
$region0: #{tpu_custom_call.1}
  #allocation0 [shape = 'u32[]', space=smem, size = 0x4, offset = 0x4, fixed_abs, tag = 'smem constant byte address 0x4 - core index']
  #allocation1 [shape = 'u32[72,128]{1,0:T(1,128)}', space=vmem, size = 0x9000, scoped, tag = 'internal scratch']
  %s0 = inlined_call_operand.vmem [shape: bf16[8,64], index: 0, kind: input, shape index: {}]
  %s1 = inlined_call_operand.vmem [shape: bf16[5,64], index: 1, kind: input, shape index: {}]
  %s2 = inlined_call_operand.vmem [shape: bf16[64,96], index: 2, kind: input, shape index: {}]
  %s3 = inlined_call_operand.vmem [shape: bf16[64,32], index: 3, kind: input, shape index: {}]
  %s4 = inlined_call_operand.vmem [shape: f32[1,64], index: 4, kind: input, shape index: {}]
  %s5 = inlined_call_operand.hbm [shape: f32[8,64], index: 5, kind: output, shape index: {}]
  %s6 = sld [smem:[#allocation0]]
  $region30: #{tpu_custom_call.1} parent=0
    _
  %s8 = ssub.s32 1, %s6
  %s9 = scalar_select 0, %s8, %s6
  $region1: #{tpu_custom_call.1} parent=0
    #allocation2 [shape = 'u8[4096]{0}', space=vmem, size = 0x1000, scoped, tag = 'output window, operand 0, single buffered']
    #allocation3 [shape = 's32[1]{0}', space=sflag, size = 0x4, scoped, tag = 'scoped memory for tpu_custom_call.1']
    %10 = vsyncpa [#allocation3], 0
    // Predicated region
    $region2: #{tpu_custom_call.1} parent=1 // pred_check
      _
    $region3: #{tpu_custom_call.1} parent=1 // pred_check_branch
      %12 = sbr.rel (0) target = $region5
    $region4: #{tpu_custom_call.1} parent=1 // pred_region
      _
    $region5: #{tpu_custom_call.1} parent=1 // pred_fallthru
      _
    // Predicated region
    $region6: #{tpu_custom_call.1} parent=1 // pred_check
      _
    $region7: #{tpu_custom_call.1} parent=1 // pred_check_branch
      %14 = sbr.rel (0) target = $region9
    $region8: #{tpu_custom_call.1} parent=1 // pred_region
      _
    $region9: #{tpu_custom_call.1} parent=1 // pred_fallthru
      _
    // Predicated region
    $region10: #{tpu_custom_call.1} parent=1 // pred_check
      _
    $region11: #{tpu_custom_call.1} parent=1 // pred_check_branch
      %16 = sbr.rel (0) target = $region13
    $region12: #{tpu_custom_call.1} parent=1 // pred_region
      _
    $region13: #{tpu_custom_call.1} parent=1 // pred_fallthru
      _
    // Predicated region
    $region14: #{tpu_custom_call.1} parent=1 // pred_check
      _
    $region15: #{tpu_custom_call.1} parent=1 // pred_check_branch
      %18 = sbr.rel (0) target = $region17
    $region16: #{tpu_custom_call.1} parent=1 // pred_region
      _
    $region17: #{tpu_custom_call.1} parent=1 // pred_fallthru
      _
    // Predicated region
    $region18: #{tpu_custom_call.1} parent=1 // pred_check
      _
    $region19: #{tpu_custom_call.1} parent=1 // pred_check_branch
      %20 = sbr.rel (0) target = $region21
    $region20: #{tpu_custom_call.1} parent=1 // pred_region
      _
    $region21: #{tpu_custom_call.1} parent=1 // pred_fallthru
      _
    %v22 = vld [vmem:[%s0] sm:$0xf]
    %v23 = vld [vmem:[%s2] sm:$0xf]
    %v24 = vld [vmem:[%s2 + $0x4] sm:$0xf]
    %v25 = vld [vmem:[%s2 + $0x8] sm:$0xf]
    %v26 = vld [vmem:[%s2 + $0xc] sm:$0xf]
    %v27 = vld [vmem:[%s2 + $0x10] sm:$0xf]
    %v28 = vld [vmem:[%s2 + $0x14] sm:$0xf]
    %v29 = vld [vmem:[%s2 + $0x18] sm:$0xf]
    %v30 = vld [vmem:[%s2 + $0x1c] sm:$0xf]
    %v39 = vunpack.c.l.b16 %v23
    %v40 = vunpack.c.l.b16 %v24
    %v41 = vunpack.c.l.b16 %v25
    %v42 = vunpack.c.l.b16 %v26
    %v43 = vunpack.c.l.b16 %v27
    %v44 = vunpack.c.l.b16 %v28
    %v45 = vunpack.c.l.b16 %v29
    %v46 = vunpack.c.l.b16 %v30
    %v47 = vpack.c.b16 %v40, %v39
    %v48 = vpack.c.b16 %v42, %v41
    %v49 = vpack.c.b16 %v44, %v43
    %v50 = vpack.c.b16 %v46, %v45
    %vm55 = vcmask 523264
    %v57 = vsel %vm55, %v22, 0
    %59 = vmatpush.bf16.msra.mxu0 0
    %60 = vmatpush.bf16.msra.mxu0 0
    %61 = vmatpush.bf16.msra.mxu0 0
    %62 = vmatpush.bf16.msra.mxu0 0
    %63 = vmatpush.bf16.msra.mxu0 %v50
    %64 = vmatpush.bf16.msra.mxu0 %v49
    %65 = vmatpush.bf16.msra.mxu0 %v48
    %66 = vmatpush.bf16.msra.mxu0 %v47
    %67 = vmatmul.bf16.gmra.mxu0 %v57
    %v68 = vpop.f32.mrf.mxu0
    %v69 = vadd.f32 0.0, %v68
    %v70 = vpop.f32.mrf.mxu0
    %71 = vdwg.mxu0
    %v72 = vld [vmem:[%s1] sm:$0x7]
    %v73 = vld [vmem:[%s3] sm:$0xf]
    %v74 = vld [vmem:[%s3 + $0x4] sm:$0xf]
    %v75 = vld [vmem:[%s3 + $0x8] sm:$0xf]
    %v76 = vld [vmem:[%s3 + $0xc] sm:$0xf]
    %v77 = vld [vmem:[%s3 + $0x10] sm:$0xf]
    %v78 = vld [vmem:[%s3 + $0x14] sm:$0xf]
    %v79 = vld [vmem:[%s3 + $0x18] sm:$0xf]
    %v80 = vld [vmem:[%s3 + $0x1c] sm:$0xf]
    %v89 = vunpack.c.l.b16 %v73
    %v90 = vunpack.c.l.b16 %v74
    %v91 = vunpack.c.l.b16 %v75
    %v92 = vunpack.c.l.b16 %v76
    %v93 = vunpack.c.l.b16 %v77
    %v94 = vunpack.c.l.b16 %v78
    %v95 = vunpack.c.l.b16 %v79
    %v96 = vunpack.c.l.b16 %v80
    %v97 = vpack.c.b16 %v90, %v89
    %v98 = vpack.c.b16 %v92, %v91
    %v99 = vpack.c.b16 %v94, %v93
    %v100 = vpack.c.b16 %v96, %v95
    %v106 = vsel %vm55, %v72, 0
    %108 = vmatpush.bf16.msra.mxu0 0
    %109 = vmatpush.bf16.msra.mxu0 0
    %110 = vmatpush.bf16.msra.mxu0 0
    %111 = vmatpush.bf16.msra.mxu0 0
    %112 = vmatpush.bf16.msra.mxu0 %v100
    %113 = vmatpush.bf16.msra.mxu0 %v99
    %114 = vmatpush.bf16.msra.mxu0 %v98
    %115 = vmatpush.bf16.msra.mxu0 %v97
    %116 = vmatmul.bf16.gmra.mxu0 %v106
    %v117 = vpop.f32.mrf.mxu0
    %v118 = vadd.f32 0.0, %v117
    %v119 = vpop.f32.mrf.mxu0
    %120 = vdwg.mxu0
    %v121 = vld [vmem:[%s4] sm:$0x1]
    %v123 = vperm.slane %v121, 0
    %v125 = vadd.f32 %v69, %v123
    %vm126 = vcmask 254976
    %v127 = vsel %vm126, %v118, -inf
    %v128 = vrot.slane %v127, 4
    %v129 = vmax.f32 %v127, %v128
    %v130 = vrot.slane %v129, 2
    %v131 = vmax.f32 %v129, %v130
    %v132 = vrot.slane %v131, 1
    %v133 = vmax.f32 %v131, %v132
    %v134 = vmax.f32 %v133, 0.0
    %vm135 = vcmask 258050
    %v136 = vsel %vm135, %v118, -inf
    %v137 = vrot.slane %v136, 4
    %v138 = vmax.f32 %v136, %v137
    %v139 = vrot.slane %v138, 2
    %v140 = vmax.f32 %v138, %v139
    %v141 = vrot.slane %v140, 1
    %v142 = vmax.f32 %v140, %v141
    %v143 = vmax.f32 %v142, 0.0
    %vm144 = vcmask 1043456
    %v145 = vsel %vm144, %v134, %v143
    %vm146 = vcmask 781824
    %v147 = vsel %vm146, %v69, -inf
    %v148 = vrot.slane %v147, 4
    %v149 = vmax.f32 %v147, %v148
    %v150 = vrot.slane %v149, 2
    %v151 = vmax.f32 %v149, %v150
    %v152 = vrot.slane %v151, 1
    %v153 = vmax.f32 %v151, %v152
    %vm154 = vcmask 785924
    %v155 = vsel %vm154, %v69, -inf
    %v156 = vrot.slane %v155, 4
    %v157 = vmax.f32 %v155, %v156
    %v158 = vrot.slane %v157, 2
    %v159 = vmax.f32 %v157, %v158
    %v160 = vrot.slane %v159, 1
    %v161 = vmax.f32 %v159, %v160
    %v162 = vsel %vm144, %v153, %v161
    %164 = vrot.lane.b32.xlu0 %v162, 96
    %v165 = vpop.permute.xlu0 %164
    %vm167 = vcmask 261120
    %v168 = vsel %vm167, %v145, %v165
    %v169 = vadd.f32 %v125, %v168
    %170 = vst.msk [vmem:[#allocation2] sm:$0xff] %vm55, %v169
    // Predicated region
    $region22: #{tpu_custom_call.1} parent=1 // pred_check
      _
    $region23: #{tpu_custom_call.1} parent=1 // pred_check_branch
      %172 = sbr.rel (0) target = $region25
    $region24: #{tpu_custom_call.1} parent=1 // pred_region
      %174 = vsyncadd [#allocation3], 0
      %s176 = sshll.u32 [#allocation2], 4
      %s177 = int_to_ptr.vmem [resolvable:$true] %s176
      %s178 = sshll.u32 %s5, 4
      %s179 = int_to_ptr.hbm [resolvable:$true] %s178
      %181 = dma.vmem_to_hbm [thread:$0]  %s177, 128, %s179, [#allocation3]
    $region25: #{tpu_custom_call.1} parent=1 // pred_fallthru
      _
    // Predicated region
    $region26: #{tpu_custom_call.1} parent=1 // pred_check
      _
    $region27: #{tpu_custom_call.1} parent=1 // pred_check_branch
      %183 = sbr.rel (0) target = $region29
    $region28: #{tpu_custom_call.1} parent=1 // pred_region
      %185 = dma.done [#allocation3], 128
    $region29: #{tpu_custom_call.1} parent=1 // pred_fallthru
      _
    %186 = vsyncpa [#allocation3], 1

</llo_original>
